<compile_context>
chip_gen: v5e
topology: v5e:2x2
jax: 0.10.0
libtpu: 0.0.40
codegen_flags: <defaults>
</compile_context>

<pallas_src>
import jax
import jax.numpy as jnp
from jax.experimental import pallas as pl
from jax.experimental.pallas import tpu as pltpu


def _expm1_accurate(x):
    # expm1 via the tanh identity: exp(x)-1 = tanh(x/2) * (exp(x)+1).
    # No cancellation near 0; both exp and tanh lower to the EUP (slack slot).
    return jnp.tanh(0.5 * x) * (jnp.exp(x) + 1.0)


def _elu(x):
    # F.elu with alpha=1.0; clamp before exp so the untaken branch stays finite.
    return jnp.where(x > 0, x, _expm1_accurate(jnp.minimum(x, 0.0)))


def _sigmoid(x):
    # Exact sigmoid (f32 parity with the PyTorch reference).
    return 1.0 / (1.0 + jnp.exp(-x))


def _dense(x, w_ref, b_ref):
    # Cast the activation to the weight dtype (no-op for f32, bf16 when the
    # wrapper pre-casts weights); accumulate in f32 on the MXU.
    w = w_ref[...]
    y = jnp.dot(x.astype(w.dtype), w, preferred_element_type=jnp.float32)
    return y + b_ref[...]


def vdecoder_kernel(z_ref,
                    w1_ref, b1_ref,
                    w2_ref, b2_ref,
                    w22_ref, b22_ref,
                    w3_ref, b3_ref,
                    out_ref):
    h = _elu(_dense(z_ref[...], w1_ref, b1_ref))
    h = _elu(_dense(h, w2_ref, b2_ref))
    h = _elu(_dense(h, w22_ref, b22_ref))
    out_ref[...] = _sigmoid(_dense(h, w3_ref, b3_ref))


def make_vdecoder_params(key, input_dim, latent_dim, layers):
    """Deterministic synthetic parameters.

    PyTorch nn.Linear(in, out) stores weight (out, in) and bias (out,).
    We store the transposed weight (in, out) and bias reshaped to (1, out).
    """
    dims = [
        (latent_dim, layers[2]),   # linear1
        (layers[2], layers[1]),    # linear2
        (layers[1], layers[0]),    # linear22
        (layers[0], input_dim),    # linear3
    ]
    params = []
    for (din, dout) in dims:
        key, kw, kb = jax.random.split(key, 3)
        bound = 1.0 / jnp.sqrt(jnp.float32(din))
        w = jax.random.uniform(kw, (din, dout), jnp.float32, -bound, bound)
        b = jax.random.uniform(kb, (1, dout), jnp.float32, -bound, bound)
        params += [w, b]
    return params


def _round_up(x, m):
    return (x + m - 1) // m * m


def vdecoder_forward(z, params, input_dim, *, max_tile_b=2048,
                     min_rows_for_tc_split=1024, use_bf16=False):
    w1, b1, w2, b2, w22, b22, w3, b3 = params
    B, latent_dim = z.shape

    if use_bf16:
        # Halve resident weight bytes; f32 accumulation keeps accuracy, but
        # the 1e-5 parity check must be relaxed when enabling this.
        w1, w2, w22, w3 = (w.astype(jnp.bfloat16) for w in (w1, w2, w22, w3))

    # --- Batch tiling: big tiles (multiple of 8 sublanes) to amortize the
    # per-grid-step overhead.  No jnp.pad: cdiv grid + Pallas ragged masking.
    tile_b = min(max_tile_b, _round_up(B, 8))
    # v7x: guarantee >=2 grid steps for large batches so the "parallel" batch
    # axis can shard across its two TensorCores (harmless on v5e/v6e).
    if B >= min_rows_for_tc_split and pl.cdiv(B, tile_b) < 2:
        tile_b = _round_up(pl.cdiv(B, 2), 8)

    grid = (pl.cdiv(B, tile_b),)

    def const_spec(arr):
        # Same block every grid step -> DMA'd once, stays resident in VMEM.
        return pl.BlockSpec(arr.shape, lambda i: (0, 0))

    in_specs = [
        pl.BlockSpec((tile_b, latent_dim), lambda i: (i, 0)),   # z: batch-tiled
        const_spec(w1), const_spec(b1),
        const_spec(w2), const_spec(b2),
        const_spec(w22), const_spec(b22),
        const_spec(w3), const_spec(b3),
    ]
    # Unpadded output: last block dim == full feature dim (legal), 8x fewer
    # HBM write bytes than a 128-lane padded output and no wrapper slice copy.
    out_spec = pl.BlockSpec((tile_b, input_dim), lambda i: (i, 0))

    x_rec = pl.pallas_call(
        vdecoder_kernel,
        out_shape=jax.ShapeDtypeStruct((B, input_dim), jnp.float32),
        grid=grid,
        in_specs=in_specs,
        out_specs=out_spec,
        compiler_params=pltpu.CompilerParams(
            dimension_semantics=("parallel",),      # batch tiles across v7x TCs
            vmem_limit_bytes=32 * 1024 * 1024,      # lift v5e's 16 MiB default
        ),
    )(z, w1, b1, w2, b2, w22, b22, w3, b3)

    return {"x_rec": x_rec}


def vdecoder_reference(z, params):
    """Pure-JAX reference for sanity checking."""
    w1, b1, w2, b2, w22, b22, w3, b3 = params
    h = jax.nn.elu(z @ w1 + b1)
    h = jax.nn.elu(h @ w2 + b2)
    h = jax.nn.elu(h @ w22 + b22)
    return jax.nn.sigmoid(h @ w3 + b3)


if __name__ == "__main__":
    # Small shapes consistent with the module:
    #   latent_dim=8, layers=[64, 48, 32], input_dim=16
    batch = 64
    input_dim = 16
    latent_dim = 8
    layers = [64, 48, 32]

    key = jax.random.PRNGKey(0)
    key, kz = jax.random.split(key)
    z = jax.random.normal(kz, (batch, latent_dim), jnp.float32)

    params = make_vdecoder_params(key, input_dim, latent_dim, layers)

    out = vdecoder_forward(z, params, input_dim)
    x_rec = jax.block_until_ready(out["x_rec"])

    ref = vdecoder_reference(z, params)
    assert x_rec.shape == (batch, input_dim)
    assert jnp.allclose(x_rec, ref, atol=1e-5, rtol=1e-5), "mismatch vs reference"

    print("KERNEL_OK")
</pallas_src>

<mosaic_0001>
module attributes {stable_mosaic.version = 11 : i64} {
  func.func @vdecoder_kernel(%arg0: i32, %arg1: memref<64x8xf32, #tpu.memory_space<vmem>>, %arg2: memref<8x32xf32, #tpu.memory_space<vmem>>, %arg3: memref<1x32xf32, #tpu.memory_space<vmem>>, %arg4: memref<32x48xf32, #tpu.memory_space<vmem>>, %arg5: memref<1x48xf32, #tpu.memory_space<vmem>>, %arg6: memref<48x64xf32, #tpu.memory_space<vmem>>, %arg7: memref<1x64xf32, #tpu.memory_space<vmem>>, %arg8: memref<64x16xf32, #tpu.memory_space<vmem>>, %arg9: memref<1x16xf32, #tpu.memory_space<vmem>>, %arg10: memref<64x16xf32, #tpu.memory_space<vmem>>) attributes {dimension_semantics = [#tpu.dimension_semantics<parallel>], iteration_bounds = array<i64: 1>, scalar_prefetch = 0 : i64, scratch_operands = 0 : i64, tpu.core_type = #tpu.core_type<tc>, window_params = [{transform_indices = @transform_0, window_bounds = array<i64: 64, 8>}, {pipeline_mode = #tpu.pipeline_mode<synchronous>, transform_indices = @transform_1, window_bounds = array<i64: 8, 32>}, {pipeline_mode = #tpu.pipeline_mode<synchronous>, transform_indices = @transform_2, window_bounds = array<i64: 1, 32>}, {pipeline_mode = #tpu.pipeline_mode<synchronous>, transform_indices = @transform_3, window_bounds = array<i64: 32, 48>}, {pipeline_mode = #tpu.pipeline_mode<synchronous>, transform_indices = @transform_4, window_bounds = array<i64: 1, 48>}, {pipeline_mode = #tpu.pipeline_mode<synchronous>, transform_indices = @transform_5, window_bounds = array<i64: 48, 64>}, {pipeline_mode = #tpu.pipeline_mode<synchronous>, transform_indices = @transform_6, window_bounds = array<i64: 1, 64>}, {pipeline_mode = #tpu.pipeline_mode<synchronous>, transform_indices = @transform_7, window_bounds = array<i64: 64, 16>}, {pipeline_mode = #tpu.pipeline_mode<synchronous>, transform_indices = @transform_8, window_bounds = array<i64: 1, 16>}, {transform_indices = @transform_9, window_bounds = array<i64: 64, 16>}]} {
    %c0 = arith.constant 0 : index
    %c0_0 = arith.constant 0 : index
    %0 = vector.load %arg1[%c0, %c0_0] : memref<64x8xf32, #tpu.memory_space<vmem>>, vector<64x8xf32>
    %c0_1 = arith.constant 0 : index
    %c0_2 = arith.constant 0 : index
    %1 = vector.load %arg2[%c0_1, %c0_2] : memref<8x32xf32, #tpu.memory_space<vmem>>, vector<8x32xf32>
    %cst = arith.constant dense<0.000000e+00> : vector<64x32xf32>
    %2 = tpu.matmul %0, %1, %cst {dimension_numbers = #tpu.dot_dimension_numbers<[1], [0], [0], [1], [0, 0, 1, 1], [], []>} : vector<64x8xf32>, vector<8x32xf32>, vector<64x32xf32> -> vector<64x32xf32>
    %c0_3 = arith.constant 0 : index
    %c0_4 = arith.constant 0 : index
    %3 = vector.load %arg3[%c0_3, %c0_4] : memref<1x32xf32, #tpu.memory_space<vmem>>, vector<1x32xf32>
    %4 = vector.broadcast %3 : vector<1x32xf32> to vector<64x32xf32>
    %5 = arith.addf %2, %4 : vector<64x32xf32>
    %cst_5 = arith.constant 0.000000e+00 : f32
    %6 = vector.broadcast %cst_5 : f32 to vector<64x32xf32>
    %7 = arith.cmpf ogt, %5, %6 : vector<64x32xf32>
    %cst_6 = arith.constant 0.000000e+00 : f32
    %8 = vector.broadcast %cst_6 : f32 to vector<64x32xf32>
    %9 = arith.minimumf %5, %8 : vector<64x32xf32>
    %cst_7 = arith.constant 5.000000e-01 : f32
    %10 = vector.broadcast %cst_7 : f32 to vector<64x32xf32>
    %11 = arith.mulf %10, %9 : vector<64x32xf32>
    %12 = math.tanh %11 : vector<64x32xf32>
    %13 = math.exp %9 : vector<64x32xf32>
    %cst_8 = arith.constant 1.000000e+00 : f32
    %14 = vector.broadcast %cst_8 : f32 to vector<64x32xf32>
    %15 = arith.addf %13, %14 : vector<64x32xf32>
    %16 = arith.mulf %12, %15 : vector<64x32xf32>
    %17 = arith.select %7, %5, %16 : vector<64x32xi1>, vector<64x32xf32>
    %c0_9 = arith.constant 0 : index
    %c0_10 = arith.constant 0 : index
    %18 = vector.load %arg4[%c0_9, %c0_10] : memref<32x48xf32, #tpu.memory_space<vmem>>, vector<32x48xf32>
    %cst_11 = arith.constant dense<0.000000e+00> : vector<64x48xf32>
    %19 = tpu.matmul %17, %18, %cst_11 {dimension_numbers = #tpu.dot_dimension_numbers<[1], [0], [0], [1], [0, 0, 1, 1], [], []>} : vector<64x32xf32>, vector<32x48xf32>, vector<64x48xf32> -> vector<64x48xf32>
    %c0_12 = arith.constant 0 : index
    %c0_13 = arith.constant 0 : index
    %20 = vector.load %arg5[%c0_12, %c0_13] : memref<1x48xf32, #tpu.memory_space<vmem>>, vector<1x48xf32>
    %21 = vector.broadcast %20 : vector<1x48xf32> to vector<64x48xf32>
    %22 = arith.addf %19, %21 : vector<64x48xf32>
    %cst_14 = arith.constant 0.000000e+00 : f32
    %23 = vector.broadcast %cst_14 : f32 to vector<64x48xf32>
    %24 = arith.cmpf ogt, %22, %23 : vector<64x48xf32>
    %cst_15 = arith.constant 0.000000e+00 : f32
    %25 = vector.broadcast %cst_15 : f32 to vector<64x48xf32>
    %26 = arith.minimumf %22, %25 : vector<64x48xf32>
    %cst_16 = arith.constant 5.000000e-01 : f32
    %27 = vector.broadcast %cst_16 : f32 to vector<64x48xf32>
    %28 = arith.mulf %27, %26 : vector<64x48xf32>
    %29 = math.tanh %28 : vector<64x48xf32>
    %30 = math.exp %26 : vector<64x48xf32>
    %cst_17 = arith.constant 1.000000e+00 : f32
    %31 = vector.broadcast %cst_17 : f32 to vector<64x48xf32>
    %32 = arith.addf %30, %31 : vector<64x48xf32>
    %33 = arith.mulf %29, %32 : vector<64x48xf32>
    %34 = arith.select %24, %22, %33 : vector<64x48xi1>, vector<64x48xf32>
    %c0_18 = arith.constant 0 : index
    %c0_19 = arith.constant 0 : index
    %35 = vector.load %arg6[%c0_18, %c0_19] : memref<48x64xf32, #tpu.memory_space<vmem>>, vector<48x64xf32>
    %cst_20 = arith.constant dense<0.000000e+00> : vector<64x64xf32>
    %36 = tpu.matmul %34, %35, %cst_20 {dimension_numbers = #tpu.dot_dimension_numbers<[1], [0], [0], [1], [0, 0, 1, 1], [], []>} : vector<64x48xf32>, vector<48x64xf32>, vector<64x64xf32> -> vector<64x64xf32>
    %c0_21 = arith.constant 0 : index
    %c0_22 = arith.constant 0 : index
    %37 = vector.load %arg7[%c0_21, %c0_22] : memref<1x64xf32, #tpu.memory_space<vmem>>, vector<1x64xf32>
    %38 = vector.broadcast %37 : vector<1x64xf32> to vector<64x64xf32>
    %39 = arith.addf %36, %38 : vector<64x64xf32>
    %cst_23 = arith.constant 0.000000e+00 : f32
    %40 = vector.broadcast %cst_23 : f32 to vector<64x64xf32>
    %41 = arith.cmpf ogt, %39, %40 : vector<64x64xf32>
    %cst_24 = arith.constant 0.000000e+00 : f32
    %42 = vector.broadcast %cst_24 : f32 to vector<64x64xf32>
    %43 = arith.minimumf %39, %42 : vector<64x64xf32>
    %cst_25 = arith.constant 5.000000e-01 : f32
    %44 = vector.broadcast %cst_25 : f32 to vector<64x64xf32>
    %45 = arith.mulf %44, %43 : vector<64x64xf32>
    %46 = math.tanh %45 : vector<64x64xf32>
    %47 = math.exp %43 : vector<64x64xf32>
    %cst_26 = arith.constant 1.000000e+00 : f32
    %48 = vector.broadcast %cst_26 : f32 to vector<64x64xf32>
    %49 = arith.addf %47, %48 : vector<64x64xf32>
    %50 = arith.mulf %46, %49 : vector<64x64xf32>
    %51 = arith.select %41, %39, %50 : vector<64x64xi1>, vector<64x64xf32>
    %c0_27 = arith.constant 0 : index
    %c0_28 = arith.constant 0 : index
    %52 = vector.load %arg8[%c0_27, %c0_28] : memref<64x16xf32, #tpu.memory_space<vmem>>, vector<64x16xf32>
    %cst_29 = arith.constant dense<0.000000e+00> : vector<64x16xf32>
    %53 = tpu.matmul %51, %52, %cst_29 {dimension_numbers = #tpu.dot_dimension_numbers<[1], [0], [0], [1], [0, 0, 1, 1], [], []>} : vector<64x64xf32>, vector<64x16xf32>, vector<64x16xf32> -> vector<64x16xf32>
    %c0_30 = arith.constant 0 : index
    %c0_31 = arith.constant 0 : index
    %54 = vector.load %arg9[%c0_30, %c0_31] : memref<1x16xf32, #tpu.memory_space<vmem>>, vector<1x16xf32>
    %55 = vector.broadcast %54 : vector<1x16xf32> to vector<64x16xf32>
    %56 = arith.addf %53, %55 : vector<64x16xf32>
    %cst_32 = arith.constant 0.000000e+00 : f32
    %57 = vector.broadcast %cst_32 : f32 to vector<64x16xf32>
    %58 = arith.subf %57, %56 : vector<64x16xf32>
    %59 = math.exp %58 : vector<64x16xf32>
    %cst_33 = arith.constant 1.000000e+00 : f32
    %60 = vector.broadcast %cst_33 : f32 to vector<64x16xf32>
    %61 = arith.addf %60, %59 : vector<64x16xf32>
    %cst_34 = arith.constant 1.000000e+00 : f32
    %62 = vector.broadcast %cst_34 : f32 to vector<64x16xf32>
    %63 = arith.divf %62, %61 : vector<64x16xf32>
    %c0_35 = arith.constant 0 : index
    %c0_36 = arith.constant 0 : index
    %64 = vector.load %arg10[%c0_35, %c0_36] : memref<64x16xf32, #tpu.memory_space<vmem>>, vector<64x16xf32>
    tpu.vector_store %arg10[%c0_35, %c0_36], %63 {strides = array<i32>} : memref<64x16xf32, #tpu.memory_space<vmem>>, vector<64x16xf32>,
    return
  }
  func.func @transform_0(%arg0: i32) -> (i32, i32) {
    %c0_i32 = arith.constant 0 : i32
    %c0_i32_0 = arith.constant 0 : i32
    return %arg0, %c0_i32 : i32, i32
  }
  func.func @transform_1(%arg0: i32) -> (i32, i32) {
    %c0_i32 = arith.constant 0 : i32
    %c0_i32_0 = arith.constant 0 : i32
    %c0_i32_1 = arith.constant 0 : i32
    return %c0_i32, %c0_i32_0 : i32, i32
  }
  func.func @transform_2(%arg0: i32) -> (i32, i32) {
    %c0_i32 = arith.constant 0 : i32
    %c0_i32_0 = arith.constant 0 : i32
    %c0_i32_1 = arith.constant 0 : i32
    return %c0_i32, %c0_i32_0 : i32, i32
  }
  func.func @transform_3(%arg0: i32) -> (i32, i32) {
    %c0_i32 = arith.constant 0 : i32
    %c0_i32_0 = arith.constant 0 : i32
    %c0_i32_1 = arith.constant 0 : i32
    return %c0_i32, %c0_i32_0 : i32, i32
  }
  func.func @transform_4(%arg0: i32) -> (i32, i32) {
    %c0_i32 = arith.constant 0 : i32
    %c0_i32_0 = arith.constant 0 : i32
    %c0_i32_1 = arith.constant 0 : i32
    return %c0_i32, %c0_i32_0 : i32, i32
  }
  func.func @transform_5(%arg0: i32) -> (i32, i32) {
    %c0_i32 = arith.constant 0 : i32
    %c0_i32_0 = arith.constant 0 : i32
    %c0_i32_1 = arith.constant 0 : i32
    return %c0_i32, %c0_i32_0 : i32, i32
  }
  func.func @transform_6(%arg0: i32) -> (i32, i32) {
    %c0_i32 = arith.constant 0 : i32
    %c0_i32_0 = arith.constant 0 : i32
    %c0_i32_1 = arith.constant 0 : i32
    return %c0_i32, %c0_i32_0 : i32, i32
  }
  func.func @transform_7(%arg0: i32) -> (i32, i32) {
    %c0_i32 = arith.constant 0 : i32
    %c0_i32_0 = arith.constant 0 : i32
    %c0_i32_1 = arith.constant 0 : i32
    return %c0_i32, %c0_i32_0 : i32, i32
  }
  func.func @transform_8(%arg0: i32) -> (i32, i32) {
    %c0_i32 = arith.constant 0 : i32
    %c0_i32_0 = arith.constant 0 : i32
    %c0_i32_1 = arith.constant 0 : i32
    return %c0_i32, %c0_i32_0 : i32, i32
  }
  func.func @transform_9(%arg0: i32) -> (i32, i32) {
    %c0_i32 = arith.constant 0 : i32
    %c0_i32_0 = arith.constant 0 : i32
    return %arg0, %c0_i32 : i32, i32
  }
}

</mosaic_0001>

<llo_original>
// kernel: tpu_custom_call.1
$region0: #{tpu_custom_call.1}
  #allocation0 [shape = 'u32[]', space=smem, size = 0x4, offset = 0x4, fixed_abs, tag = 'smem constant byte address 0x4 - core index']
  #allocation1 [shape = 'u32[72,128]{1,0:T(1,128)}', space=vmem, size = 0x9000, scoped, tag = 'internal scratch']
  %s0 = inlined_call_operand.vmem [shape: f32[64,8], index: 0, kind: input, shape index: {}]
  %s1 = inlined_call_operand.vmem [shape: f32[8,32], index: 1, kind: input, shape index: {}]
  %s2 = inlined_call_operand.vmem [shape: f32[1,32], index: 2, kind: input, shape index: {}]
  %s3 = inlined_call_operand.vmem [shape: f32[32,48], index: 3, kind: input, shape index: {}]
  %s4 = inlined_call_operand.vmem [shape: f32[1,48], index: 4, kind: input, shape index: {}]
  %s5 = inlined_call_operand.vmem [shape: f32[48,64], index: 5, kind: input, shape index: {}]
  %s6 = inlined_call_operand.vmem [shape: f32[1,64], index: 6, kind: input, shape index: {}]
  %s7 = inlined_call_operand.vmem [shape: f32[64,16], index: 7, kind: input, shape index: {}]
  %s8 = inlined_call_operand.vmem [shape: f32[1,16], index: 8, kind: input, shape index: {}]
  %s9 = inlined_call_operand.vmem [shape: f32[64,16], index: 9, kind: output, shape index: {}]
  %s10 = sld [smem:[#allocation0]]
  $region46: #{tpu_custom_call.1} parent=0
    _
  %s12 = ssub.s32 1, %s10
  %s13 = scalar_select 0, %s12, %s10
  // Predicated region
  $region2: #{tpu_custom_call.1} parent=0 // pred_check
    _
  $region3: #{tpu_custom_call.1} parent=0 // pred_check_branch
    %15 = sbr.rel (0) target = $region5
  $region4: #{tpu_custom_call.1} parent=0 // pred_region
    _
  $region5: #{tpu_custom_call.1} parent=0 // pred_fallthru
    _
  // Predicated region
  $region6: #{tpu_custom_call.1} parent=0 // pred_check
    _
  $region7: #{tpu_custom_call.1} parent=0 // pred_check_branch
    %17 = sbr.rel (0) target = $region9
  $region8: #{tpu_custom_call.1} parent=0 // pred_region
    _
  $region9: #{tpu_custom_call.1} parent=0 // pred_fallthru
    _
  // Predicated region
  $region10: #{tpu_custom_call.1} parent=0 // pred_check
    _
  $region11: #{tpu_custom_call.1} parent=0 // pred_check_branch
    %19 = sbr.rel (0) target = $region13
  $region12: #{tpu_custom_call.1} parent=0 // pred_region
    _
  $region13: #{tpu_custom_call.1} parent=0 // pred_fallthru
    _
  // Predicated region
  $region14: #{tpu_custom_call.1} parent=0 // pred_check
    _
  $region15: #{tpu_custom_call.1} parent=0 // pred_check_branch
    %21 = sbr.rel (0) target = $region17
  $region16: #{tpu_custom_call.1} parent=0 // pred_region
    _
  $region17: #{tpu_custom_call.1} parent=0 // pred_fallthru
    _
  // Predicated region
  $region18: #{tpu_custom_call.1} parent=0 // pred_check
    _
  $region19: #{tpu_custom_call.1} parent=0 // pred_check_branch
    %23 = sbr.rel (0) target = $region21
  $region20: #{tpu_custom_call.1} parent=0 // pred_region
    _
  $region21: #{tpu_custom_call.1} parent=0 // pred_fallthru
    _
  // Predicated region
  $region22: #{tpu_custom_call.1} parent=0 // pred_check
    _
  $region23: #{tpu_custom_call.1} parent=0 // pred_check_branch
    %25 = sbr.rel (0) target = $region25
  $region24: #{tpu_custom_call.1} parent=0 // pred_region
    _
  $region25: #{tpu_custom_call.1} parent=0 // pred_fallthru
    _
  // Predicated region
  $region26: #{tpu_custom_call.1} parent=0 // pred_check
    _
  $region27: #{tpu_custom_call.1} parent=0 // pred_check_branch
    %27 = sbr.rel (0) target = $region29
  $region28: #{tpu_custom_call.1} parent=0 // pred_region
    _
  $region29: #{tpu_custom_call.1} parent=0 // pred_fallthru
    _
  // Predicated region
  $region30: #{tpu_custom_call.1} parent=0 // pred_check
    _
  $region31: #{tpu_custom_call.1} parent=0 // pred_check_branch
    %29 = sbr.rel (0) target = $region33
  $region32: #{tpu_custom_call.1} parent=0 // pred_region
    _
  $region33: #{tpu_custom_call.1} parent=0 // pred_fallthru
    _
  // Predicated region
  $region34: #{tpu_custom_call.1} parent=0 // pred_check
    _
  $region35: #{tpu_custom_call.1} parent=0 // pred_check_branch
    %31 = sbr.rel (0) target = $region37
  $region36: #{tpu_custom_call.1} parent=0 // pred_region
    _
  $region37: #{tpu_custom_call.1} parent=0 // pred_fallthru
    _
  %v32 = vld [vmem:[%s0] sm:$0xff]
  %v33 = vld [vmem:[%s0 + $0x8] sm:$0xff]
  %v34 = vld [vmem:[%s0 + $0x10] sm:$0xff]
  %v35 = vld [vmem:[%s0 + $0x18] sm:$0xff]
  %v36 = vld [vmem:[%s0 + $0x20] sm:$0xff]
  %v37 = vld [vmem:[%s0 + $0x28] sm:$0xff]
  %v38 = vld [vmem:[%s0 + $0x30] sm:$0xff]
  %v39 = vld [vmem:[%s0 + $0x38] sm:$0xff]
  %v40 = vld [vmem:[%s1] sm:$0xff]
  %v41 = vld [vmem:[%s2] sm:$0x1]
  %v43 = vperm.slane %v41, 0
  %vm45 = vcmask 64512
  %v47 = vsel %vm45, %v32, 0
  %v50 = vsel %vm45, %v33, 0
  %v53 = vsel %vm45, %v34, 0
  %v56 = vsel %vm45, %v35, 0
  %v59 = vsel %vm45, %v36, 0
  %v62 = vsel %vm45, %v37, 0
  %v65 = vsel %vm45, %v38, 0
  %v68 = vsel %vm45, %v39, 0
  %70 = vmatpush.msra.mxu0 0.0
  %71 = vmatpush.msra.mxu0 0.0
  %72 = vmatpush.msra.mxu0 0.0
  %73 = vmatpush.msra.mxu0 0.0
  %74 = vmatpush.msra.mxu0 0.0
  %75 = vmatpush.msra.mxu0 0.0
  %76 = vmatpush.msra.mxu0 0.0
  %77 = vmatpush.msra.mxu0 0.0
  %78 = vmatpush.msra.mxu0 0.0
  %79 = vmatpush.msra.mxu0 0.0
  %80 = vmatpush.msra.mxu0 0.0
  %81 = vmatpush.msra.mxu0 0.0
  %82 = vmatpush.msra.mxu0 0.0
  %83 = vmatpush.msra.mxu0 0.0
  %84 = vmatpush.msra.mxu0 0.0
  %85 = vmatpush.msra.mxu0 %v40
  %86 = vmatmul.f32.gmra.mxu0 %v47
  %v87 = vpop.f32.mrf.mxu0
  %v88 = vadd.f32 %v43, %v87
  %89 = vmatmul.f32.gmra.mxu0 %v50
  %v90 = vpop.f32.mrf.mxu0
  %v91 = vadd.f32 %v43, %v90
  %92 = vmatmul.f32.gmra.mxu0 %v53
  %v93 = vpop.f32.mrf.mxu0
  %v94 = vadd.f32 %v43, %v93
  %95 = vmatmul.f32.gmra.mxu0 %v56
  %v96 = vpop.f32.mrf.mxu0
  %v97 = vadd.f32 %v43, %v96
  %98 = vmatmul.f32.gmra.mxu0 %v59
  %v99 = vpop.f32.mrf.mxu0
  %v100 = vadd.f32 %v43, %v99
  %101 = vmatmul.f32.gmra.mxu0 %v62
  %v102 = vpop.f32.mrf.mxu0
  %v103 = vadd.f32 %v43, %v102
  %104 = vmatmul.f32.gmra.mxu0 %v65
  %v105 = vpop.f32.mrf.mxu0
  %v106 = vadd.f32 %v43, %v105
  %107 = vmatmul.f32.gmra.mxu0 %v68
  %v108 = vpop.f32.mrf.mxu0
  %v109 = vadd.f32 %v43, %v108
  %110 = vdwg.mxu0
  %vm111 = vcmp.gt.f32.partialorder %v88, 0.0
  %vm112 = vcmp.gt.f32.partialorder %v91, 0.0
  %vm113 = vcmp.gt.f32.partialorder %v94, 0.0
  %vm114 = vcmp.gt.f32.partialorder %v97, 0.0
  %vm115 = vcmp.gt.f32.partialorder %v100, 0.0
  %vm116 = vcmp.gt.f32.partialorder %v103, 0.0
  %vm117 = vcmp.gt.f32.partialorder %v106, 0.0
  %vm118 = vcmp.gt.f32.partialorder %v109, 0.0
  %v119 = vmin.f32 %v88, 0.0
  %v120 = vmin.f32 %v91, 0.0
  %v121 = vmin.f32 %v94, 0.0
  %v122 = vmin.f32 %v97, 0.0
  %v123 = vmin.f32 %v100, 0.0
  %v124 = vmin.f32 %v103, 0.0
  %v125 = vmin.f32 %v106, 0.0
  %v126 = vmin.f32 %v109, 0.0
  %v127 = vmul.f32 %v119, 0.5
  %v128 = vmul.f32 %v120, 0.5
  %v129 = vmul.f32 %v121, 0.5
  %v130 = vmul.f32 %v122, 0.5
  %v131 = vmul.f32 %v123, 0.5
  %v132 = vmul.f32 %v124, 0.5
  %v133 = vmul.f32 %v125, 0.5
  %v134 = vmul.f32 %v126, 0.5
  %v135 = vtanh.pop %v127
  %v136 = vtanh.pop %v128
  %v137 = vtanh.pop %v129
  %v138 = vtanh.pop %v130
  %v139 = vtanh.pop %v131
  %v140 = vtanh.pop %v132
  %v141 = vtanh.pop %v133
  %v142 = vtanh.pop %v134
  %v143 = vmul.f32 %v119, 1.442695
  %v144 = vpow.pop %v143
  %v145 = vmul.f32 %v120, 1.442695
  %v146 = vpow.pop %v145
  %v147 = vmul.f32 %v121, 1.442695
  %v148 = vpow.pop %v147
  %v149 = vmul.f32 %v122, 1.442695
  %v150 = vpow.pop %v149
  %v151 = vmul.f32 %v123, 1.442695
  %v152 = vpow.pop %v151
  %v153 = vmul.f32 %v124, 1.442695
  %v154 = vpow.pop %v153
  %v155 = vmul.f32 %v125, 1.442695
  %v156 = vpow.pop %v155
  %v157 = vmul.f32 %v126, 1.442695
  %v158 = vpow.pop %v157
  %v159 = vadd.f32 %v144, 1.0
  %v160 = vadd.f32 %v146, 1.0
  %v161 = vadd.f32 %v148, 1.0
  %v162 = vadd.f32 %v150, 1.0
  %v163 = vadd.f32 %v152, 1.0
  %v164 = vadd.f32 %v154, 1.0
  %v165 = vadd.f32 %v156, 1.0
  %v166 = vadd.f32 %v158, 1.0
  %v167 = vmul.f32 %v135, %v159
  %v168 = vmul.f32 %v136, %v160
  %v169 = vmul.f32 %v137, %v161
  %v170 = vmul.f32 %v138, %v162
  %v171 = vmul.f32 %v139, %v163
  %v172 = vmul.f32 %v140, %v164
  %v173 = vmul.f32 %v141, %v165
  %v174 = vmul.f32 %v142, %v166
  %v175 = vsel %vm111, %v88, %v167
  %v176 = vsel %vm112, %v91, %v168
  %v177 = vsel %vm113, %v94, %v169
  %v178 = vsel %vm114, %v97, %v170
  %v179 = vsel %vm115, %v100, %v171
  %v180 = vsel %vm116, %v103, %v172
  %v181 = vsel %vm117, %v106, %v173
  %v182 = vsel %vm118, %v109, %v174
  %v183 = vld [vmem:[%s3] sm:$0xff]
  %v184 = vld [vmem:[%s3 + $0x8] sm:$0xff]
  %v185 = vld [vmem:[%s3 + $0x10] sm:$0xff]
  %v186 = vld [vmem:[%s3 + $0x18] sm:$0xff]
  %v187 = vld [vmem:[%s4] sm:$0x1]
  %v189 = vperm.slane %v187, 0
  %vm191 = vcmask 261120
  %v193 = vsel %vm191, %v175, 0
  %v196 = vsel %vm191, %v176, 0
  %v199 = vsel %vm191, %v177, 0
  %v202 = vsel %vm191, %v178, 0
  %v205 = vsel %vm191, %v179, 0
  %v208 = vsel %vm191, %v180, 0
  %v211 = vsel %vm191, %v181, 0
  %v214 = vsel %vm191, %v182, 0
  %216 = vmatpush.msra.mxu0 0.0
  %217 = vmatpush.msra.mxu0 0.0
  %218 = vmatpush.msra.mxu0 0.0
  %219 = vmatpush.msra.mxu0 0.0
  %220 = vmatpush.msra.mxu0 0.0
  %221 = vmatpush.msra.mxu0 0.0
  %222 = vmatpush.msra.mxu0 0.0
  %223 = vmatpush.msra.mxu0 0.0
  %224 = vmatpush.msra.mxu0 0.0
  %225 = vmatpush.msra.mxu0 0.0
  %226 = vmatpush.msra.mxu0 0.0
  %227 = vmatpush.msra.mxu0 0.0
  %228 = vmatpush.msra.mxu0 %v186
  %229 = vmatpush.msra.mxu0 %v185
  %230 = vmatpush.msra.mxu0 %v184
  %231 = vmatpush.msra.mxu0 %v183
  %232 = vmatmul.f32.gmra.mxu0 %v193
  %v233 = vpop.f32.mrf.mxu0
  %v234 = vadd.f32 %v189, %v233
  %235 = vmatmul.f32.gmra.mxu0 %v196
  %v236 = vpop.f32.mrf.mxu0
  %v237 = vadd.f32 %v189, %v236
  %238 = vmatmul.f32.gmra.mxu0 %v199
  %v239 = vpop.f32.mrf.mxu0
  %v240 = vadd.f32 %v189, %v239
  %241 = vmatmul.f32.gmra.mxu0 %v202
  %v242 = vpop.f32.mrf.mxu0
  %v243 = vadd.f32 %v189, %v242
  %244 = vmatmul.f32.gmra.mxu0 %v205
  %v245 = vpop.f32.mrf.mxu0
  %v246 = vadd.f32 %v189, %v245
  %247 = vmatmul.f32.gmra.mxu0 %v208
  %v248 = vpop.f32.mrf.mxu0
  %v249 = vadd.f32 %v189, %v248
  %250 = vmatmul.f32.gmra.mxu0 %v211
  %v251 = vpop.f32.mrf.mxu0
  %v252 = vadd.f32 %v189, %v251
  %253 = vmatmul.f32.gmra.mxu0 %v214
  %v254 = vpop.f32.mrf.mxu0
  %v255 = vadd.f32 %v189, %v254
  %256 = vdwg.mxu0
  %vm257 = vcmp.gt.f32.partialorder %v234, 0.0
  %vm258 = vcmp.gt.f32.partialorder %v237, 0.0
  %vm259 = vcmp.gt.f32.partialorder %v240, 0.0
  %vm260 = vcmp.gt.f32.partialorder %v243, 0.0
  %vm261 = vcmp.gt.f32.partialorder %v246, 0.0
  %vm262 = vcmp.gt.f32.partialorder %v249, 0.0
  %vm263 = vcmp.gt.f32.partialorder %v252, 0.0
  %vm264 = vcmp.gt.f32.partialorder %v255, 0.0
  %v265 = vmin.f32 %v234, 0.0
  %v266 = vmin.f32 %v237, 0.0
  %v267 = vmin.f32 %v240, 0.0
  %v268 = vmin.f32 %v243, 0.0
  %v269 = vmin.f32 %v246, 0.0
  %v270 = vmin.f32 %v249, 0.0
  %v271 = vmin.f32 %v252, 0.0
  %v272 = vmin.f32 %v255, 0.0
  %v273 = vmul.f32 %v265, 0.5
  %v274 = vmul.f32 %v266, 0.5
  %v275 = vmul.f32 %v267, 0.5
  %v276 = vmul.f32 %v268, 0.5
  %v277 = vmul.f32 %v269, 0.5
  %v278 = vmul.f32 %v270, 0.5
  %v279 = vmul.f32 %v271, 0.5
  %v280 = vmul.f32 %v272, 0.5
  %v281 = vtanh.pop %v273
  %v282 = vtanh.pop %v274
  %v283 = vtanh.pop %v275
  %v284 = vtanh.pop %v276
  %v285 = vtanh.pop %v277
  %v286 = vtanh.pop %v278
  %v287 = vtanh.pop %v279
  %v288 = vtanh.pop %v280
  %v289 = vmul.f32 %v265, 1.442695
  %v290 = vpow.pop %v289
  %v291 = vmul.f32 %v266, 1.442695
  %v292 = vpow.pop %v291
  %v293 = vmul.f32 %v267, 1.442695
  %v294 = vpow.pop %v293
  %v295 = vmul.f32 %v268, 1.442695
  %v296 = vpow.pop %v295
  %v297 = vmul.f32 %v269, 1.442695
  %v298 = vpow.pop %v297
  %v299 = vmul.f32 %v270, 1.442695
  %v300 = vpow.pop %v299
  %v301 = vmul.f32 %v271, 1.442695
  %v302 = vpow.pop %v301
  %v303 = vmul.f32 %v272, 1.442695
  %v304 = vpow.pop %v303
  %v305 = vadd.f32 %v290, 1.0
  %v306 = vadd.f32 %v292, 1.0
  %v307 = vadd.f32 %v294, 1.0
  %v308 = vadd.f32 %v296, 1.0
  %v309 = vadd.f32 %v298, 1.0
  %v310 = vadd.f32 %v300, 1.0
  %v311 = vadd.f32 %v302, 1.0
  %v312 = vadd.f32 %v304, 1.0
  %v313 = vmul.f32 %v281, %v305
  %v314 = vmul.f32 %v282, %v306
  %v315 = vmul.f32 %v283, %v307
  %v316 = vmul.f32 %v284, %v308
  %v317 = vmul.f32 %v285, %v309
  %v318 = vmul.f32 %v286, %v310
  %v319 = vmul.f32 %v287, %v311
  %v320 = vmul.f32 %v288, %v312
  %v321 = vsel %vm257, %v234, %v313
  %v322 = vsel %vm258, %v237, %v314
  %v323 = vsel %vm259, %v240, %v315
  %v324 = vsel %vm260, %v243, %v316
  %v325 = vsel %vm261, %v246, %v317
  %v326 = vsel %vm262, %v249, %v318
  %v327 = vsel %vm263, %v252, %v319
  %v328 = vsel %vm264, %v255, %v320
  %v329 = vld [vmem:[%s5] sm:$0xff]
  %v330 = vld [vmem:[%s5 + $0x8] sm:$0xff]
  %v331 = vld [vmem:[%s5 + $0x10] sm:$0xff]
  %v332 = vld [vmem:[%s5 + $0x18] sm:$0xff]
  %v333 = vld [vmem:[%s5 + $0x20] sm:$0xff]
  %v334 = vld [vmem:[%s5 + $0x28] sm:$0xff]
  %v335 = vld [vmem:[%s6] sm:$0x1]
  %v337 = vperm.slane %v335, 0
  %vm339 = vcmask 392192
  %v341 = vsel %vm339, %v321, 0
  %v344 = vsel %vm339, %v322, 0
  %v347 = vsel %vm339, %v323, 0
  %v350 = vsel %vm339, %v324, 0
  %v353 = vsel %vm339, %v325, 0
  %v356 = vsel %vm339, %v326, 0
  %v359 = vsel %vm339, %v327, 0
  %v362 = vsel %vm339, %v328, 0
  %364 = vmatpush.msra.mxu0 0.0
  %365 = vmatpush.msra.mxu0 0.0
  %366 = vmatpush.msra.mxu0 0.0
  %367 = vmatpush.msra.mxu0 0.0
  %368 = vmatpush.msra.mxu0 0.0
  %369 = vmatpush.msra.mxu0 0.0
  %370 = vmatpush.msra.mxu0 0.0
  %371 = vmatpush.msra.mxu0 0.0
  %372 = vmatpush.msra.mxu0 0.0
  %373 = vmatpush.msra.mxu0 0.0
  %374 = vmatpush.msra.mxu0 %v334
  %375 = vmatpush.msra.mxu0 %v333
  %376 = vmatpush.msra.mxu0 %v332
  %377 = vmatpush.msra.mxu0 %v331
  %378 = vmatpush.msra.mxu0 %v330
  %379 = vmatpush.msra.mxu0 %v329
  %380 = vmatmul.f32.gmra.mxu0 %v341
  %v381 = vpop.f32.mrf.mxu0
  %v382 = vadd.f32 %v337, %v381
  %383 = vmatmul.f32.gmra.mxu0 %v344
  %v384 = vpop.f32.mrf.mxu0
  %v385 = vadd.f32 %v337, %v384
  %386 = vmatmul.f32.gmra.mxu0 %v347
  %v387 = vpop.f32.mrf.mxu0
  %v388 = vadd.f32 %v337, %v387
  %389 = vmatmul.f32.gmra.mxu0 %v350
  %v390 = vpop.f32.mrf.mxu0
  %v391 = vadd.f32 %v337, %v390
  %392 = vmatmul.f32.gmra.mxu0 %v353
  %v393 = vpop.f32.mrf.mxu0
  %v394 = vadd.f32 %v337, %v393
  %395 = vmatmul.f32.gmra.mxu0 %v356
  %v396 = vpop.f32.mrf.mxu0
  %v397 = vadd.f32 %v337, %v396
  %398 = vmatmul.f32.gmra.mxu0 %v359
  %v399 = vpop.f32.mrf.mxu0
  %v400 = vadd.f32 %v337, %v399
  %401 = vmatmul.f32.gmra.mxu0 %v362
  %v402 = vpop.f32.mrf.mxu0
  %v403 = vadd.f32 %v337, %v402
  %404 = vdwg.mxu0
  %vm405 = vcmp.gt.f32.partialorder %v382, 0.0
  %vm406 = vcmp.gt.f32.partialorder %v385, 0.0
  %vm407 = vcmp.gt.f32.partialorder %v388, 0.0
  %vm408 = vcmp.gt.f32.partialorder %v391, 0.0
  %vm409 = vcmp.gt.f32.partialorder %v394, 0.0
  %vm410 = vcmp.gt.f32.partialorder %v397, 0.0
  %vm411 = vcmp.gt.f32.partialorder %v400, 0.0
  %vm412 = vcmp.gt.f32.partialorder %v403, 0.0
  %v413 = vmin.f32 %v382, 0.0
  %v414 = vmin.f32 %v385, 0.0
  %v415 = vmin.f32 %v388, 0.0
  %v416 = vmin.f32 %v391, 0.0
  %v417 = vmin.f32 %v394, 0.0
  %v418 = vmin.f32 %v397, 0.0
  %v419 = vmin.f32 %v400, 0.0
  %v420 = vmin.f32 %v403, 0.0
  %v421 = vmul.f32 %v413, 0.5
  %v422 = vmul.f32 %v414, 0.5
  %v423 = vmul.f32 %v415, 0.5
  %v424 = vmul.f32 %v416, 0.5
  %v425 = vmul.f32 %v417, 0.5
  %v426 = vmul.f32 %v418, 0.5
  %v427 = vmul.f32 %v419, 0.5
  %v428 = vmul.f32 %v420, 0.5
  %v429 = vtanh.pop %v421
  %v430 = vtanh.pop %v422
  %v431 = vtanh.pop %v423
  %v432 = vtanh.pop %v424
  %v433 = vtanh.pop %v425
  %v434 = vtanh.pop %v426
  %v435 = vtanh.pop %v427
  %v436 = vtanh.pop %v428
  %v437 = vmul.f32 %v413, 1.442695
  %v438 = vpow.pop %v437
  %v439 = vmul.f32 %v414, 1.442695
  %v440 = vpow.pop %v439
  %v441 = vmul.f32 %v415, 1.442695
  %v442 = vpow.pop %v441
  %v443 = vmul.f32 %v416, 1.442695
  %v444 = vpow.pop %v443
  %v445 = vmul.f32 %v417, 1.442695
  %v446 = vpow.pop %v445
  %v447 = vmul.f32 %v418, 1.442695
  %v448 = vpow.pop %v447
  %v449 = vmul.f32 %v419, 1.442695
  %v450 = vpow.pop %v449
  %v451 = vmul.f32 %v420, 1.442695
  %v452 = vpow.pop %v451
  %v453 = vadd.f32 %v438, 1.0
  %v454 = vadd.f32 %v440, 1.0
  %v455 = vadd.f32 %v442, 1.0
  %v456 = vadd.f32 %v444, 1.0
  %v457 = vadd.f32 %v446, 1.0
  %v458 = vadd.f32 %v448, 1.0
  %v459 = vadd.f32 %v450, 1.0
  %v460 = vadd.f32 %v452, 1.0
  %v461 = vmul.f32 %v429, %v453
  %v462 = vmul.f32 %v430, %v454
  %v463 = vmul.f32 %v431, %v455
  %v464 = vmul.f32 %v432, %v456
  %v465 = vmul.f32 %v433, %v457
  %v466 = vmul.f32 %v434, %v458
  %v467 = vmul.f32 %v435, %v459
  %v468 = vmul.f32 %v436, %v460
  %v469 = vsel %vm405, %v382, %v461
  %v470 = vsel %vm406, %v385, %v462
  %v471 = vsel %vm407, %v388, %v463
  %v472 = vsel %vm408, %v391, %v464
  %v473 = vsel %vm409, %v394, %v465
  %v474 = vsel %vm410, %v397, %v466
  %v475 = vsel %vm411, %v400, %v467
  %v476 = vsel %vm412, %v403, %v468
  %v477 = vld [vmem:[%s7] sm:$0xff]
  %v478 = vld [vmem:[%s7 + $0x8] sm:$0xff]
  %v479 = vld [vmem:[%s7 + $0x10] sm:$0xff]
  %v480 = vld [vmem:[%s7 + $0x18] sm:$0xff]
  %v481 = vld [vmem:[%s7 + $0x20] sm:$0xff]
  %v482 = vld [vmem:[%s7 + $0x28] sm:$0xff]
  %v483 = vld [vmem:[%s7 + $0x30] sm:$0xff]
  %v484 = vld [vmem:[%s7 + $0x38] sm:$0xff]
  %v485 = vld [vmem:[%s8] sm:$0x1]
  %v487 = vperm.slane %v485, 0
  %vm489 = vcmask 523264
  %v491 = vsel %vm489, %v469, 0
  %v494 = vsel %vm489, %v470, 0
  %v497 = vsel %vm489, %v471, 0
  %v500 = vsel %vm489, %v472, 0
  %v503 = vsel %vm489, %v473, 0
  %v506 = vsel %vm489, %v474, 0
  %v509 = vsel %vm489, %v475, 0
  %v512 = vsel %vm489, %v476, 0
  %514 = vmatpush.msra.mxu0 0.0
  %515 = vmatpush.msra.mxu0 0.0
  %516 = vmatpush.msra.mxu0 0.0
  %517 = vmatpush.msra.mxu0 0.0
  %518 = vmatpush.msra.mxu0 0.0
  %519 = vmatpush.msra.mxu0 0.0
  %520 = vmatpush.msra.mxu0 0.0
  %521 = vmatpush.msra.mxu0 0.0
  %522 = vmatpush.msra.mxu0 %v484
  %523 = vmatpush.msra.mxu0 %v483
  %524 = vmatpush.msra.mxu0 %v482
  %525 = vmatpush.msra.mxu0 %v481
  %526 = vmatpush.msra.mxu0 %v480
  %527 = vmatpush.msra.mxu0 %v479
  %528 = vmatpush.msra.mxu0 %v478
  %529 = vmatpush.msra.mxu0 %v477
  %530 = vmatmul.f32.gmra.mxu0 %v491
  %v531 = vpop.f32.mrf.mxu0
  %v532 = vadd.f32 %v487, %v531
  %533 = vmatmul.f32.gmra.mxu0 %v494
  %v534 = vpop.f32.mrf.mxu0
  %v535 = vadd.f32 %v487, %v534
  %536 = vmatmul.f32.gmra.mxu0 %v497
  %v537 = vpop.f32.mrf.mxu0
  %v538 = vadd.f32 %v487, %v537
  %539 = vmatmul.f32.gmra.mxu0 %v500
  %v540 = vpop.f32.mrf.mxu0
  %v541 = vadd.f32 %v487, %v540
  %542 = vmatmul.f32.gmra.mxu0 %v503
  %v543 = vpop.f32.mrf.mxu0
  %v544 = vadd.f32 %v487, %v543
  %545 = vmatmul.f32.gmra.mxu0 %v506
  %v546 = vpop.f32.mrf.mxu0
  %v547 = vadd.f32 %v487, %v546
  %548 = vmatmul.f32.gmra.mxu0 %v509
  %v549 = vpop.f32.mrf.mxu0
  %v550 = vadd.f32 %v487, %v549
  %551 = vmatmul.f32.gmra.mxu0 %v512
  %v552 = vpop.f32.mrf.mxu0
  %v553 = vadd.f32 %v487, %v552
  %554 = vdwg.mxu0
  %v555 = vsub.f32 0.0, %v532
  %v556 = vsub.f32 0.0, %v535
  %v557 = vsub.f32 0.0, %v538
  %v558 = vsub.f32 0.0, %v541
  %v559 = vsub.f32 0.0, %v544
  %v560 = vsub.f32 0.0, %v547
  %v561 = vsub.f32 0.0, %v550
  %v562 = vsub.f32 0.0, %v553
  %v563 = vmul.f32 %v555, 1.442695
  %v564 = vpow.pop %v563
  %v565 = vmul.f32 %v556, 1.442695
  %v566 = vpow.pop %v565
  %v567 = vmul.f32 %v557, 1.442695
  %v568 = vpow.pop %v567
  %v569 = vmul.f32 %v558, 1.442695
  %v570 = vpow.pop %v569
  %v571 = vmul.f32 %v559, 1.442695
  %v572 = vpow.pop %v571
  %v573 = vmul.f32 %v560, 1.442695
  %v574 = vpow.pop %v573
  %v575 = vmul.f32 %v561, 1.442695
  %v576 = vpow.pop %v575
  %v577 = vmul.f32 %v562, 1.442695
  %v578 = vpow.pop %v577
  %v579 = vadd.f32 %v564, 1.0
  %v580 = vadd.f32 %v566, 1.0
  %v581 = vadd.f32 %v568, 1.0
  %v582 = vadd.f32 %v570, 1.0
  %v583 = vadd.f32 %v572, 1.0
  %v584 = vadd.f32 %v574, 1.0
  %v585 = vadd.f32 %v576, 1.0
  %v586 = vadd.f32 %v578, 1.0
  %v587 = vrcp.pop %v579
  %v588 = vmul.f32 %v579, %v587
  %v589 = vsub.f32 1.0, %v588
  %v590 = vmul.f32 %v587, %v589
  %v591 = vadd.f32 %v587, %v590
  %vm592 = vweird.f32 %v579
  %vm593 = vweird.f32 %v587
  %vm594 = vmor %vm592, %vm593
  %v595 = vsel %vm594, %v587, %v591
  %v596 = vand.u32 2147483647, %v579
  %vm597 = vcmp.eq.f32.partialorder %v596, 8.507059e+37
  %v598 = vand.u32 %v579, 2147483648
  %v599 = vor.u32 1.1754944e-38, %v598
  %v600 = vsel %vm597, %v599, %v595
  %v601 = vmul.f32 1.0, %v600
  %v602 = vrcp.pop %v580
  %v603 = vmul.f32 %v580, %v602
  %v604 = vsub.f32 1.0, %v603
  %v605 = vmul.f32 %v602, %v604
  %v606 = vadd.f32 %v602, %v605
  %vm607 = vweird.f32 %v580
  %vm608 = vweird.f32 %v602
  %vm609 = vmor %vm607, %vm608
  %v610 = vsel %vm609, %v602, %v606
  %v611 = vand.u32 2147483647, %v580
  %vm612 = vcmp.eq.f32.partialorder %v611, 8.507059e+37
  %v613 = vand.u32 %v580, 2147483648
  %v614 = vor.u32 1.1754944e-38, %v613
  %v615 = vsel %vm612, %v614, %v610
  %v616 = vmul.f32 1.0, %v615
  %v617 = vrcp.pop %v581
  %v618 = vmul.f32 %v581, %v617
  %v619 = vsub.f32 1.0, %v618
  %v620 = vmul.f32 %v617, %v619
  %v621 = vadd.f32 %v617, %v620
  %vm622 = vweird.f32 %v581
  %vm623 = vweird.f32 %v617
  %vm624 = vmor %vm622, %vm623
  %v625 = vsel %vm624, %v617, %v621
  %v626 = vand.u32 2147483647, %v581
  %vm627 = vcmp.eq.f32.partialorder %v626, 8.507059e+37
  %v628 = vand.u32 %v581, 2147483648
  %v629 = vor.u32 1.1754944e-38, %v628
  %v630 = vsel %vm627, %v629, %v625
  %v631 = vmul.f32 1.0, %v630
  %v632 = vrcp.pop %v582
  %v633 = vmul.f32 %v582, %v632
  %v634 = vsub.f32 1.0, %v633
  %v635 = vmul.f32 %v632, %v634
  %v636 = vadd.f32 %v632, %v635
  %vm637 = vweird.f32 %v582
  %vm638 = vweird.f32 %v632
  %vm639 = vmor %vm637, %vm638
  %v640 = vsel %vm639, %v632, %v636
  %v641 = vand.u32 2147483647, %v582
  %vm642 = vcmp.eq.f32.partialorder %v641, 8.507059e+37
  %v643 = vand.u32 %v582, 2147483648
  %v644 = vor.u32 1.1754944e-38, %v643
  %v645 = vsel %vm642, %v644, %v640
  %v646 = vmul.f32 1.0, %v645
  %v647 = vrcp.pop %v583
  %v648 = vmul.f32 %v583, %v647
  %v649 = vsub.f32 1.0, %v648
  %v650 = vmul.f32 %v647, %v649
  %v651 = vadd.f32 %v647, %v650
  %vm652 = vweird.f32 %v583
  %vm653 = vweird.f32 %v647
  %vm654 = vmor %vm652, %vm653
  %v655 = vsel %vm654, %v647, %v651
  %v656 = vand.u32 2147483647, %v583
  %vm657 = vcmp.eq.f32.partialorder %v656, 8.507059e+37
  %v658 = vand.u32 %v583, 2147483648
  %v659 = vor.u32 1.1754944e-38, %v658
  %v660 = vsel %vm657, %v659, %v655
  %v661 = vmul.f32 1.0, %v660
  %v662 = vrcp.pop %v584
  %v663 = vmul.f32 %v584, %v662
  %v664 = vsub.f32 1.0, %v663
  %v665 = vmul.f32 %v662, %v664
  %v666 = vadd.f32 %v662, %v665
  %vm667 = vweird.f32 %v584
  %vm668 = vweird.f32 %v662
  %vm669 = vmor %vm667, %vm668
  %v670 = vsel %vm669, %v662, %v666
  %v671 = vand.u32 2147483647, %v584
  %vm672 = vcmp.eq.f32.partialorder %v671, 8.507059e+37
  %v673 = vand.u32 %v584, 2147483648
  %v674 = vor.u32 1.1754944e-38, %v673
  %v675 = vsel %vm672, %v674, %v670
  %v676 = vmul.f32 1.0, %v675
  %v677 = vrcp.pop %v585
  %v678 = vmul.f32 %v585, %v677
  %v679 = vsub.f32 1.0, %v678
  %v680 = vmul.f32 %v677, %v679
  %v681 = vadd.f32 %v677, %v680
  %vm682 = vweird.f32 %v585
  %vm683 = vweird.f32 %v677
  %vm684 = vmor %vm682, %vm683
  %v685 = vsel %vm684, %v677, %v681
  %v686 = vand.u32 2147483647, %v585
  %vm687 = vcmp.eq.f32.partialorder %v686, 8.507059e+37
  %v688 = vand.u32 %v585, 2147483648
  %v689 = vor.u32 1.1754944e-38, %v688
  %v690 = vsel %vm687, %v689, %v685
  %v691 = vmul.f32 1.0, %v690
  %v692 = vrcp.pop %v586
  %v693 = vmul.f32 %v586, %v692
  %v694 = vsub.f32 1.0, %v693
  %v695 = vmul.f32 %v692, %v694
  %v696 = vadd.f32 %v692, %v695
  %vm697 = vweird.f32 %v586
  %vm698 = vweird.f32 %v692
  %vm699 = vmor %vm697, %vm698
  %v700 = vsel %vm699, %v692, %v696
  %v701 = vand.u32 2147483647, %v586
  %vm702 = vcmp.eq.f32.partialorder %v701, 8.507059e+37
  %v703 = vand.u32 %v586, 2147483648
  %v704 = vor.u32 1.1754944e-38, %v703
  %v705 = vsel %vm702, %v704, %v700
  %v706 = vmul.f32 1.0, %v705
  %vm707 = vcmask 130048
  %708 = vst.msk [vmem:[%s9] sm:$0xff] %vm707, %v601
  %709 = vst.msk [vmem:[%s9 + $0x8] sm:$0xff] %vm707, %v616
  %710 = vst.msk [vmem:[%s9 + $0x10] sm:$0xff] %vm707, %v631
  %711 = vst.msk [vmem:[%s9 + $0x18] sm:$0xff] %vm707, %v646
  %712 = vst.msk [vmem:[%s9 + $0x20] sm:$0xff] %vm707, %v661
  %713 = vst.msk [vmem:[%s9 + $0x28] sm:$0xff] %vm707, %v676
  %714 = vst.msk [vmem:[%s9 + $0x30] sm:$0xff] %vm707, %v691
  %715 = vst.msk [vmem:[%s9 + $0x38] sm:$0xff] %vm707, %v706
  // Predicated region
  $region38: #{tpu_custom_call.1} parent=0 // pred_check
    _
  $region39: #{tpu_custom_call.1} parent=0 // pred_check_branch
    %717 = sbr.rel (0) target = $region41
  $region40: #{tpu_custom_call.1} parent=0 // pred_region
    _
  $region41: #{tpu_custom_call.1} parent=0 // pred_fallthru
    _
  // Predicated region
  $region42: #{tpu_custom_call.1} parent=0 // pred_check
    _
  $region43: #{tpu_custom_call.1} parent=0 // pred_check_branch
    %719 = sbr.rel (0) target = $region45
  $region44: #{tpu_custom_call.1} parent=0 // pred_region
    _
  $region45: #{tpu_custom_call.1} parent=0 // pred_fallthru
    _

</llo_original>
